<compile_context>
chip_gen: v6e
topology: v6e:2x2x1
jax: 0.10.0
libtpu: 0.0.40
codegen_flags: <defaults>
</compile_context>

<pallas_src>
import functools

import jax
import jax.numpy as jnp
from jax.experimental import pallas as pl
from jax.experimental.pallas import tpu as pltpu

ALPHA = 1.0                              # module's self.alpha (== 1, folded away)
LARGE_NUMBER_FOR_SIGMOID = 500.0         # module's sigmoid sharpness

_SMALL_BYTES = 512 * 1024                # below this, fused XLA already hits roofline
_TARGET_BLOCK_BYTES = 4 * 1024 * 1024    # ~4 MiB streamed blocks amortize per-step overhead


def _denoise_kernel(bias_ref, x_ref, o_ref, *, compute_dtype):
    # bias_ref: (1,) f32 in SMEM; x_ref / o_ref: (blk_rows, lane) tiles in VMEM.
    # sigmoid(z) = 0.5 * (1 + tanh(z/2)) -> single EUP op, 500/2 = 250 folded.
    bias = jnp.maximum(bias_ref[0], jnp.float32(0.0)).astype(compute_dtype)  # clamp folded in
    x = x_ref[...].astype(compute_dtype)
    slope = jnp.asarray(0.5 * LARGE_NUMBER_FOR_SIGMOID, compute_dtype)
    one = jnp.asarray(1.0, compute_dtype)
    half = jnp.asarray(0.5, compute_dtype)
    t = jnp.tanh(slope * (jnp.abs(x) - bias))
    o_ref[...] = ((half * x) * (one + t)).astype(o_ref.dtype)


def _dense_forward(x, bias):
    # Fused-XLA path for tiny / non-128-aligned tensors (one read + one write pass).
    b = jnp.maximum(jnp.asarray(bias, jnp.float32), 0.0)
    xf = x.astype(jnp.float32)
    gate = jax.nn.sigmoid(LARGE_NUMBER_FOR_SIGMOID * (ALPHA * jnp.abs(xf) - b))
    return (gate * xf).astype(x.dtype)


def _device_kind():
    try:
        return jax.devices()[0].device_kind.lower()
    except Exception:
        return ""


def _choose_lane(n):
    for lane in (1024, 512, 256, 128):
        if n % lane == 0:
            return lane
    return None


def denoising_single_orient(x, bias):
    """x: any-shape float array (NCHW in the module). bias: scalar threshold."""
    orig_shape = x.shape
    dtype = x.dtype
    n = x.size
    itemsize = jnp.dtype(dtype).itemsize

    # Fast path: tiny tensors (launch overhead dominates) or element counts not
    # divisible by 128 (pad + slice-back would triple HBM traffic on a mem-bound op).
    if n * itemsize < _SMALL_BYTES or n % 128 != 0:
        return _dense_forward(x, bias)

    lane = _choose_lane(n)
    rows = n // lane
    x2d = x.reshape(rows, lane)          # contiguous reshape: no pad, no copy

    kind = _device_kind()
    is_v7 = ("v7" in kind) or ("7x" in kind)
    is_v5 = "v5" in kind

    # bf16 gate math only where the VPU/EUP are bf16-capable (v6e/v7x).
    compute_dtype = jnp.bfloat16 if (dtype == jnp.bfloat16 and not is_v5) else jnp.float32

    # Sublane granule: 8 rows for 32-bit, 16 for bf16, 32 for 8-bit dtypes.
    sub = 8 * max(1, 4 // itemsize)

    # ~4 MiB blocks (dtype-aware), rounded to the sublane granule...
    blk_rows = max(sub, (_TARGET_BLOCK_BYTES // (lane * itemsize)) // sub * sub)
    # ...but keep >= 2 grid steps so DMA overlaps compute and both v7x cores work.
    if rows >= 2 * sub:
        blk_rows = min(blk_rows, max(sub, (rows // 2) // sub * sub))
    if blk_rows >= rows:
        blk_rows = rows                  # single full-extent block (legal for any rows)

    grid = (pl.cdiv(rows, blk_rows),)    # ragged last block handled by Pallas

    block_bytes = blk_rows * lane * itemsize
    vmem_cap = (48 << 20) if is_v7 else (96 << 20)          # v7x: 64 MiB VMEM/TC
    vmem_limit = min(vmem_cap, 2 * 2 * block_bytes + (4 << 20))  # 2x(in+out) + headroom

    bias1 = jnp.asarray(bias, jnp.float32).reshape(1)

    out2d = pl.pallas_call(
        functools.partial(_denoise_kernel, compute_dtype=compute_dtype),
        out_shape=jax.ShapeDtypeStruct((rows, lane), dtype),
        grid=grid,
        in_specs=[
            pl.BlockSpec(memory_space=pltpu.SMEM),                 # scalar bias
            pl.BlockSpec((blk_rows, lane), lambda i: (i, 0)),      # streamed input
        ],
        out_specs=pl.BlockSpec((blk_rows, lane), lambda i: (i, 0)),
        compiler_params=pltpu.CompilerParams(
            dimension_semantics=("parallel",),
            vmem_limit_bytes=vmem_limit,
        ),
    )(bias1, x2d)

    return out2d.reshape(orig_shape)


def _reference(x, bias):
    b = jnp.maximum(jnp.asarray(bias, jnp.float32), 0.0)
    xf = x.astype(jnp.float32)
    gate = jax.nn.sigmoid(LARGE_NUMBER_FOR_SIGMOID * (ALPHA * jnp.abs(xf) - b))
    return (gate * xf).astype(x.dtype)


if __name__ == "__main__":
    key = jax.random.PRNGKey(0)
    kx, kb, k2, k3 = jax.random.split(key, 4)

    # Small NCHW input consistent with the module's elementwise forward
    # (takes the fused-XLA small-tensor fast path).
    x = jax.random.normal(kx, (2, 4, 16, 16), dtype=jnp.float32)
    # Deterministic stand-in for nn.Parameter(torch.tensor(np.random.randn())).
    bias = jax.random.normal(kb, (), dtype=jnp.float32)
    out = jax.block_until_ready(denoising_single_orient(x, bias))
    assert out.shape == x.shape and out.dtype == x.dtype
    assert jnp.allclose(out, _reference(x, bias), atol=1e-5, rtol=1e-5)

    # Larger NCHW input that exercises the Pallas streaming kernel, including a
    # ragged (partial) last grid block: 2*100*32*32 = 204800 elems -> rows=200, blk=96.
    x_big = jax.random.normal(k2, (2, 100, 32, 32), dtype=jnp.float32)
    out_big = jax.block_until_ready(denoising_single_orient(x_big, bias))
    assert out_big.shape == x_big.shape and out_big.dtype == x_big.dtype
    assert jnp.allclose(out_big, _reference(x_big, bias), atol=1e-5, rtol=1e-5)

    # Negative bias (forward zeroes it) and a non-128-multiple element count.
    x_odd = jax.random.normal(k3, (3, 5, 7, 11), dtype=jnp.float32)   # 1155 elems
    neg_bias = -jnp.abs(bias)
    out_odd = jax.block_until_ready(denoising_single_orient(x_odd, neg_bias))
    assert jnp.allclose(out_odd, _reference(x_odd, neg_bias), atol=1e-5, rtol=1e-5)

    print("KERNEL_OK")
</pallas_src>

<mosaic_0001>
module attributes {stable_mosaic.version = 11 : i64} {
  func.func @_denoise_kernel(%arg0: i32, %arg1: memref<1xf32, #tpu.memory_space<smem>>, %arg2: memref<96x1024xf32, #tpu.memory_space<vmem>>, %arg3: memref<96x1024xf32, #tpu.memory_space<vmem>>) attributes {dimension_semantics = [#tpu.dimension_semantics<parallel>], iteration_bounds = array<i64: 3>, scalar_prefetch = 0 : i64, scratch_operands = 0 : i64, tpu.core_type = #tpu.core_type<tc>, window_params = [{transform_indices = @transform_0, window_bounds = array<i64: 1>}, {transform_indices = @transform_1, window_bounds = array<i64: 96, 1024>}, {transform_indices = @transform_2, window_bounds = array<i64: 96, 1024>}]} {
    %c0 = arith.constant 0 : index
    %0 = memref.load %arg1[%c0] : memref<1xf32, #tpu.memory_space<smem>>
    %cst = arith.constant 0.000000e+00 : f32
    %1 = arith.maximumf %0, %cst : f32
    %c0_0 = arith.constant 0 : index
    %c0_1 = arith.constant 0 : index
    %2 = vector.load %arg2[%c0_0, %c0_1] : memref<96x1024xf32, #tpu.memory_space<vmem>>, vector<96x1024xf32>
    %3 = math.absf %2 : vector<96x1024xf32>
    %4 = vector.broadcast %1 : f32 to vector<96x1024xf32>
    %5 = arith.subf %3, %4 : vector<96x1024xf32>
    %cst_2 = arith.constant 2.500000e+02 : f32
    %6 = vector.broadcast %cst_2 : f32 to vector<96x1024xf32>
    %7 = arith.mulf %6, %5 : vector<96x1024xf32>
    %8 = math.tanh %7 : vector<96x1024xf32>
    %cst_3 = arith.constant 5.000000e-01 : f32
    %9 = vector.broadcast %cst_3 : f32 to vector<96x1024xf32>
    %10 = arith.mulf %9, %2 : vector<96x1024xf32>
    %cst_4 = arith.constant 1.000000e+00 : f32
    %11 = vector.broadcast %cst_4 : f32 to vector<96x1024xf32>
    %12 = arith.addf %11, %8 : vector<96x1024xf32>
    %13 = arith.mulf %10, %12 : vector<96x1024xf32>
    %c0_5 = arith.constant 0 : index
    %c0_6 = arith.constant 0 : index
    %14 = vector.load %arg3[%c0_5, %c0_6] : memref<96x1024xf32, #tpu.memory_space<vmem>>, vector<96x1024xf32>
    tpu.vector_store %arg3[%c0_5, %c0_6], %13 {strides = array<i32>} : memref<96x1024xf32, #tpu.memory_space<vmem>>, vector<96x1024xf32>,
    return
  }
  func.func @transform_0(%arg0: i32) -> i32 {
    %c0_i32 = arith.constant 0 : i32
    %c0_i32_0 = arith.constant 0 : i32
    return %c0_i32 : i32
  }
  func.func @transform_1(%arg0: i32) -> (i32, i32) {
    %c0_i32 = arith.constant 0 : i32
    %c0_i32_0 = arith.constant 0 : i32
    return %arg0, %c0_i32 : i32, i32
  }
  func.func @transform_2(%arg0: i32) -> (i32, i32) {
    %c0_i32 = arith.constant 0 : i32
    %c0_i32_0 = arith.constant 0 : i32
    return %arg0, %c0_i32 : i32, i32
  }
}

</mosaic_0001>

<llo_original>
// kernel: tpu_custom_call.1
$region0: #{tpu_custom_call.1}
  #allocation0 [shape = 'u32[]', space=smem, size = 0x4, offset = 0x4, fixed_abs, tag = 'smem constant byte address 0x4 - core index']
  #allocation1 [shape = 'u32[144,128]{1,0:T(1,128)}', space=vmem, size = 0x12000, scoped, tag = 'internal scratch']
  #allocation2 [shape = 'f32[1]{0:T(128)S(6)}', space=smem, size = 0x200, scoped, tag = 'scoped memory for tpu_custom_call.1']
  %s0 = inlined_call_operand.<no memory space> [shape: f32[1], index: 0, kind: input, shape index: {}]
  %s1 = inlined_call_operand.hbm [shape: f32[200,1024], index: 1, kind: input, shape index: {}]
  %s2 = inlined_call_operand.hbm [shape: f32[200,1024], index: 2, kind: output, shape index: {}]
  %s3 = sld [smem:[#allocation0]]
  $region45: #{tpu_custom_call.1} parent=0
    _
  %s5 = ssub.s32 1, %s3
  %s6 = scalar_select 0, %s5, %s3
  %7 = sst [smem:[#allocation2]] %s0
  $region1: #{tpu_custom_call.1} parent=0
    #allocation3 [shape = 'u8[786432]{0}', space=vmem, size = 0xc0000, scoped, tag = 'input window, operand 1']
    #allocation4 [shape = 's32[2]{0}', space=sflag, size = 0x8, scoped, tag = 'scoped memory for tpu_custom_call.1']
    #allocation5 [shape = 's32[2]{0}', space=sflag, size = 0x8, scoped, tag = 'scoped memory for tpu_custom_call.1']
    #allocation6 [shape = 'u8[786432]{0}', space=vmem, size = 0xc0000, scoped, tag = 'output window, operand 0']
    %8 = vsyncpa [#allocation4], 0
    %s9 = scalar_lea.sflag [#allocation4], 1
    %10 = vsyncpa %s9, 0
    %11 = vsyncpa [#allocation5], 0
    %s12 = scalar_lea.sflag [#allocation5], 1
    %13 = vsyncpa %s12, 0
    loop: start=0, step=1, limit=5
    $region2: #{tpu_custom_call.1} parent=1 // loop_pre_header
      _
    $region3: #{tpu_custom_call.1} parent=1 // loop_header
      %s15 = sphi 0, %s19
      %p16 = scmp.ge.s32.totalorder %s15, 5
      %s23 = sphi 0, %s23
      %s25 = sphi 0, %s23
      %s26 = sphi 0, %s25
      %s40 = sphi 0, %s26
      %s46 = sphi 0, %s48
      %s49 = sphi 0, %s46
      %s50 = sphi 0, %s49
      %s66 = sphi 0, %s50
      %s72 = sphi 0, %s74
      %s75 = sphi 0, %s72
      %s76 = sphi 0, %s75
      %s92 = sphi 0, %s76
    $region4: #{tpu_custom_call.1} parent=1 // loop_header_branch
      %18 = sbr.rel (%p16) target = $region8
    $region5: #{tpu_custom_call.1} parent=1 // loop_body
      %s20 = ssub.s32 %s15, 1
      %s21 = ssub.s32 %s15, 2
      %s22 = sadd.s32 %s15, 1
      %s24 = sadd.s32 %s23, 1
      %p27 = scmp.eq.s32.totalorder %s15, 2
      %p28 = scmp.ne.s32.totalorder %s23, %s25
      %p29 = scmp.eq.s32.totalorder %s15, 0
      %p30 = por %p28, %p29
      %p31 = scmp.ne.s32.totalorder %s23, %s25
      %p32 = scmp.eq.s32.totalorder %s20, 2
      %p33 = por %p31, %p32
      %p34 = scmp.ne.s32.totalorder %s25, %s26
      %p35 = scmp.eq.s32.totalorder %s20, 0
      %p36 = por %p34, %p35
      %p37 = scmp.ne.s32.totalorder %s25, %s26
      %p38 = scmp.eq.s32.totalorder %s21, 2
      %p39 = por %p37, %p38
      %p41 = scmp.ne.s32.totalorder %s26, %s40
      %p42 = scmp.eq.s32.totalorder %s21, 0
      %p43 = por %p41, %p42
      %s44 = ssub.s32 %s15, %s22
      %p45 = scmp.eq.s32.totalorder %s44, 0
      %s47 = sadd.s32 %s46, 1
      %s48 = scalar_select %p45, %s46, %s47
      %p51 = pneg %p45
      %p52 = scmp.eq.s32.totalorder %s15, 2
      %p53 = por %p51, %p52
      %p54 = scmp.ne.s32.totalorder %s46, %s49
      %p55 = scmp.eq.s32.totalorder %s15, 0
      %p56 = por %p54, %p55
      %p57 = scmp.ne.s32.totalorder %s46, %s49
      %p58 = scmp.eq.s32.totalorder %s20, 2
      %p59 = por %p57, %p58
      %p60 = scmp.ne.s32.totalorder %s49, %s50
      %p61 = scmp.eq.s32.totalorder %s20, 0
      %p62 = por %p60, %p61
      %p63 = scmp.ne.s32.totalorder %s49, %s50
      %p64 = scmp.eq.s32.totalorder %s21, 2
      %p65 = por %p63, %p64
      %p67 = scmp.ne.s32.totalorder %s50, %s66
      %p68 = scmp.eq.s32.totalorder %s21, 0
      %p69 = por %p67, %p68
      %s70 = ssub.s32 %s15, %s22
      %p71 = scmp.eq.s32.totalorder %s70, 0
      %s73 = sadd.s32 %s72, 1
      %s74 = scalar_select %p71, %s72, %s73
      %p77 = pneg %p71
      %p78 = scmp.eq.s32.totalorder %s15, 2
      %p79 = por %p77, %p78
      %p80 = scmp.ne.s32.totalorder %s72, %s75
      %p81 = scmp.eq.s32.totalorder %s15, 0
      %p82 = por %p80, %p81
      %p83 = scmp.ne.s32.totalorder %s72, %s75
      %p84 = scmp.eq.s32.totalorder %s20, 2
      %p85 = por %p83, %p84
      %p86 = scmp.ne.s32.totalorder %s75, %s76
      %p87 = scmp.eq.s32.totalorder %s20, 0
      %p88 = por %p86, %p87
      %p89 = scmp.ne.s32.totalorder %s75, %s76
      %p90 = scmp.eq.s32.totalorder %s21, 2
      %p91 = por %p89, %p90
      %p93 = scmp.ne.s32.totalorder %s76, %s92
      %p94 = scmp.eq.s32.totalorder %s21, 0
      %p95 = por %p93, %p94
      %p96 = scmp.le.s32.totalorder 1, %s15
      %p97 = scmp.lt.s32.totalorder %s15, 4
      %p98 = pnand %p96, %p97
      %p99 = pneg %p98
      // Predicated region
      $region9: #{tpu_custom_call.1} parent=5 // pred_check
        _
      $region10: #{tpu_custom_call.1} parent=5 // pred_check_branch
        %101 = sbr.rel (%p98) target = $region12
      $region11: #{tpu_custom_call.1} parent=5 // pred_region
        %s102 = ssub.s32 %s15, 1
        // Predicated region
        $region13: #{tpu_custom_call.1} parent=11 // pred_check
          %p103 = pneg %p36
        $region14: #{tpu_custom_call.1} parent=11 // pred_check_branch
          %105 = sbr.rel (%p103) target = $region16
        $region15: #{tpu_custom_call.1} parent=11 // pred_region
          _
        $region16: #{tpu_custom_call.1} parent=11 // pred_fallthru
          _
      $region12: #{tpu_custom_call.1} parent=5 // pred_fallthru
        _
      %p106 = scmp.lt.s32.totalorder %s15, 3
      // Predicated region
      $region17: #{tpu_custom_call.1} parent=5 // pred_check
        %p107 = pneg %p106
      $region18: #{tpu_custom_call.1} parent=5 // pred_check_branch
        %109 = sbr.rel (%p107) target = $region20
      $region19: #{tpu_custom_call.1} parent=5 // pred_region
        // Predicated region
        $region21: #{tpu_custom_call.1} parent=19 // pred_check
          %p110 = pneg %p56
        $region22: #{tpu_custom_call.1} parent=19 // pred_check_branch
          %112 = sbr.rel (%p110) target = $region24
        $region23: #{tpu_custom_call.1} parent=19 // pred_region
          %s113 = sand.u32 %s46, 1
          %s114 = scalar_lea.sflag [#allocation4], %s113
          %s115 = sand.u32 %s46, 1
          %s116 = smul.addr %s115, 768
          %s117 = scalar_lea.vmem [#allocation3], %s116
          %s118 = smul.u32 12, %s15
          %s119 = ssub.s32 25, %s118
          %p120 = scmp.lt.s32.totalorder %s119, 12
          %s121 = scalar_select %p120, %s119, 12
          %s122 = smul.u32 128, %s121
          %s123 = smul.u32 %s122, 8
          %s125 = ssub.s32 12288, %s123
          %126 = vsyncadd %s114, %s125
          %p127 = scmp.ne.s32.totalorder 0, %s123
          %s128 = smul.addr %s118, 8
          %s129 = smul.addr %s128, 128
          %s130 = scalar_lea.hbm %s1, %s129
          %s131 = smul.u32 64, %s121
          %s132 = sshll.u32 %s117, 4
          %s133 = int_to_ptr.vmem [resolvable:$true] %s132
          %s134 = sshll.u32 %s131, 4
          %138 = dma.hbm_to_vmem [thread:$0]  (%p127), %s130, %s134, %s133, %s114, 1024, 1024, 64
        $region24: #{tpu_custom_call.1} parent=19 // pred_fallthru
          _
      $region20: #{tpu_custom_call.1} parent=5 // pred_fallthru
        _
      %p139 = scmp.le.s32.totalorder 1, %s15
      %p140 = scmp.lt.s32.totalorder %s15, 4
      %p141 = pnand %p139, %p140
      %p142 = pneg %p141
      // Predicated region
      $region25: #{tpu_custom_call.1} parent=5 // pred_check
        _
      $region26: #{tpu_custom_call.1} parent=5 // pred_check_branch
        %144 = sbr.rel (%p141) target = $region28
      $region27: #{tpu_custom_call.1} parent=5 // pred_region
        %s145 = ssub.s32 %s15, 1
        %s146 = sand.u32 %s49, 1
        %s147 = scalar_lea.sflag [#allocation4], %s146
        %s148 = sand.u32 %s49, 1
        %s149 = smul.addr %s148, 768
        %s150 = scalar_lea.vmem [#allocation3], %s149
        // Predicated region
        $region29: #{tpu_custom_call.1} parent=27 // pred_check
          %p151 = pneg %p62
        $region30: #{tpu_custom_call.1} parent=27 // pred_check_branch
          %153 = sbr.rel (%p151) target = $region32
        $region31: #{tpu_custom_call.1} parent=27 // pred_region
          %154 = dma.done %s147, 12288
        $region32: #{tpu_custom_call.1} parent=27 // pred_fallthru
          _
        %p155 = pneg %p36
        %p156 = pneg %p33
        %s157 = sand.u32 %s49, 1
        %s158 = scalar_lea.sflag [#allocation4], %s157
        %s159 = sand.u32 %s49, 1
        %s160 = smul.addr %s159, 768
        %s161 = scalar_lea.vmem [#allocation3], %s160
        %p162 = pneg %p62
        %p163 = pneg %p59
        %p164 = pneg %p88
        %p165 = pneg %p85
        %s166 = sand.u32 %s75, 1
        %s167 = scalar_lea.sflag [#allocation5], %s166
        %s168 = sand.u32 %s75, 1
        %s169 = smul.addr %s168, 768
        %s170 = scalar_lea.vmem [#allocation6], %s169
        %s171 = smul.u32 12, %s20
        %s172 = ssub.s32 25, %s171
        %p173 = scmp.lt.s32.totalorder %s172, 12
        %s174 = scalar_select %p173, %s172, 12
        %s175 = smul.u32 128, %s174
        %s176 = smul.u32 %s175, 8
        %s177 = smul.u32 12, %s20
        %s178 = ssub.s32 25, %s177
        %p179 = scmp.lt.s32.totalorder %s178, 12
        %s180 = scalar_select %p179, %s178, 12
        %s181 = smul.u32 128, %s180
        %s182 = smul.u32 %s181, 8
        %s183 = sld [smem:[#allocation2]]
        %s184 = smax.f32 %s183, 0.0
        %v185 = vld [vmem:[%s150] sm:$0xff]
        %v186 = vld [vmem:[%s150 + $0x8] sm:$0xff]
        %v187 = vld [vmem:[%s150 + $0x10] sm:$0xff]
        %v188 = vld [vmem:[%s150 + $0x18] sm:$0xff]
        %v189 = vld [vmem:[%s150 + $0x20] sm:$0xff]
        %v190 = vld [vmem:[%s150 + $0x28] sm:$0xff]
        %v191 = vld [vmem:[%s150 + $0x30] sm:$0xff]
        %v192 = vld [vmem:[%s150 + $0x38] sm:$0xff]
        %v193 = vld [vmem:[%s150 + $0x40] sm:$0xff]
        %v194 = vld [vmem:[%s150 + $0x48] sm:$0xff]
        %v195 = vld [vmem:[%s150 + $0x50] sm:$0xff]
        %v196 = vld [vmem:[%s150 + $0x58] sm:$0xff]
        %v197 = vld [vmem:[%s150 + $0x60] sm:$0xff]
        %v198 = vld [vmem:[%s150 + $0x68] sm:$0xff]
        %v199 = vld [vmem:[%s150 + $0x70] sm:$0xff]
        %v200 = vld [vmem:[%s150 + $0x78] sm:$0xff]
        %v201 = vld [vmem:[%s150 + $0x80] sm:$0xff]
        %v202 = vld [vmem:[%s150 + $0x88] sm:$0xff]
        %v203 = vld [vmem:[%s150 + $0x90] sm:$0xff]
        %v204 = vld [vmem:[%s150 + $0x98] sm:$0xff]
        %v205 = vld [vmem:[%s150 + $0xa0] sm:$0xff]
        %v206 = vld [vmem:[%s150 + $0xa8] sm:$0xff]
        %v207 = vld [vmem:[%s150 + $0xb0] sm:$0xff]
        %v208 = vld [vmem:[%s150 + $0xb8] sm:$0xff]
        %v209 = vld [vmem:[%s150 + $0xc0] sm:$0xff]
        %v210 = vld [vmem:[%s150 + $0xc8] sm:$0xff]
        %v211 = vld [vmem:[%s150 + $0xd0] sm:$0xff]
        %v212 = vld [vmem:[%s150 + $0xd8] sm:$0xff]
        %v213 = vld [vmem:[%s150 + $0xe0] sm:$0xff]
        %v214 = vld [vmem:[%s150 + $0xe8] sm:$0xff]
        %v215 = vld [vmem:[%s150 + $0xf0] sm:$0xff]
        %v216 = vld [vmem:[%s150 + $0xf8] sm:$0xff]
        %v217 = vld [vmem:[%s150 + $0x100] sm:$0xff]
        %v218 = vld [vmem:[%s150 + $0x108] sm:$0xff]
        %v219 = vld [vmem:[%s150 + $0x110] sm:$0xff]
        %v220 = vld [vmem:[%s150 + $0x118] sm:$0xff]
        %v221 = vld [vmem:[%s150 + $0x120] sm:$0xff]
        %v222 = vld [vmem:[%s150 + $0x128] sm:$0xff]
        %v223 = vld [vmem:[%s150 + $0x130] sm:$0xff]
        %v224 = vld [vmem:[%s150 + $0x138] sm:$0xff]
        %v225 = vld [vmem:[%s150 + $0x140] sm:$0xff]
        %v226 = vld [vmem:[%s150 + $0x148] sm:$0xff]
        %v227 = vld [vmem:[%s150 + $0x150] sm:$0xff]
        %v228 = vld [vmem:[%s150 + $0x158] sm:$0xff]
        %v229 = vld [vmem:[%s150 + $0x160] sm:$0xff]
        %v230 = vld [vmem:[%s150 + $0x168] sm:$0xff]
        %v231 = vld [vmem:[%s150 + $0x170] sm:$0xff]
        %v232 = vld [vmem:[%s150 + $0x178] sm:$0xff]
        %v233 = vld [vmem:[%s150 + $0x180] sm:$0xff]
        %v234 = vld [vmem:[%s150 + $0x188] sm:$0xff]
        %v235 = vld [vmem:[%s150 + $0x190] sm:$0xff]
        %v236 = vld [vmem:[%s150 + $0x198] sm:$0xff]
        %v237 = vld [vmem:[%s150 + $0x1a0] sm:$0xff]
        %v238 = vld [vmem:[%s150 + $0x1a8] sm:$0xff]
        %v239 = vld [vmem:[%s150 + $0x1b0] sm:$0xff]
        %v240 = vld [vmem:[%s150 + $0x1b8] sm:$0xff]
        %v241 = vld [vmem:[%s150 + $0x1c0] sm:$0xff]
        %v242 = vld [vmem:[%s150 + $0x1c8] sm:$0xff]
        %v243 = vld [vmem:[%s150 + $0x1d0] sm:$0xff]
        %v244 = vld [vmem:[%s150 + $0x1d8] sm:$0xff]
        %v245 = vld [vmem:[%s150 + $0x1e0] sm:$0xff]
        %v246 = vld [vmem:[%s150 + $0x1e8] sm:$0xff]
        %v247 = vld [vmem:[%s150 + $0x1f0] sm:$0xff]
        %v248 = vld [vmem:[%s150 + $0x1f8] sm:$0xff]
        %v249 = vld [vmem:[%s150 + $0x200] sm:$0xff]
        %v250 = vld [vmem:[%s150 + $0x208] sm:$0xff]
        %v251 = vld [vmem:[%s150 + $0x210] sm:$0xff]
        %v252 = vld [vmem:[%s150 + $0x218] sm:$0xff]
        %v253 = vld [vmem:[%s150 + $0x220] sm:$0xff]
        %v254 = vld [vmem:[%s150 + $0x228] sm:$0xff]
        %v255 = vld [vmem:[%s150 + $0x230] sm:$0xff]
        %v256 = vld [vmem:[%s150 + $0x238] sm:$0xff]
        %v257 = vld [vmem:[%s150 + $0x240] sm:$0xff]
        %v258 = vld [vmem:[%s150 + $0x248] sm:$0xff]
        %v259 = vld [vmem:[%s150 + $0x250] sm:$0xff]
        %v260 = vld [vmem:[%s150 + $0x258] sm:$0xff]
        %v261 = vld [vmem:[%s150 + $0x260] sm:$0xff]
        %v262 = vld [vmem:[%s150 + $0x268] sm:$0xff]
        %v263 = vld [vmem:[%s150 + $0x270] sm:$0xff]
        %v264 = vld [vmem:[%s150 + $0x278] sm:$0xff]
        %v265 = vld [vmem:[%s150 + $0x280] sm:$0xff]
        %v266 = vld [vmem:[%s150 + $0x288] sm:$0xff]
        %v267 = vld [vmem:[%s150 + $0x290] sm:$0xff]
        %v268 = vld [vmem:[%s150 + $0x298] sm:$0xff]
        %v269 = vld [vmem:[%s150 + $0x2a0] sm:$0xff]
        %v270 = vld [vmem:[%s150 + $0x2a8] sm:$0xff]
        %v271 = vld [vmem:[%s150 + $0x2b0] sm:$0xff]
        %v272 = vld [vmem:[%s150 + $0x2b8] sm:$0xff]
        %v273 = vld [vmem:[%s150 + $0x2c0] sm:$0xff]
        %v274 = vld [vmem:[%s150 + $0x2c8] sm:$0xff]
        %v275 = vld [vmem:[%s150 + $0x2d0] sm:$0xff]
        %v276 = vld [vmem:[%s150 + $0x2d8] sm:$0xff]
        %v277 = vld [vmem:[%s150 + $0x2e0] sm:$0xff]
        %v278 = vld [vmem:[%s150 + $0x2e8] sm:$0xff]
        %v279 = vld [vmem:[%s150 + $0x2f0] sm:$0xff]
        %v280 = vld [vmem:[%s150 + $0x2f8] sm:$0xff]
        %v281 = vand.u32 2147483647, %v185
        %v282 = vand.u32 2147483647, %v186
        %v283 = vand.u32 2147483647, %v187
        %v284 = vand.u32 2147483647, %v188
        %v285 = vand.u32 2147483647, %v189
        %v286 = vand.u32 2147483647, %v190
        %v287 = vand.u32 2147483647, %v191
        %v288 = vand.u32 2147483647, %v192
        %v289 = vand.u32 2147483647, %v193
        %v290 = vand.u32 2147483647, %v194
        %v291 = vand.u32 2147483647, %v195
        %v292 = vand.u32 2147483647, %v196
        %v293 = vand.u32 2147483647, %v197
        %v294 = vand.u32 2147483647, %v198
        %v295 = vand.u32 2147483647, %v199
        %v296 = vand.u32 2147483647, %v200
        %v297 = vand.u32 2147483647, %v201
        %v298 = vand.u32 2147483647, %v202
        %v299 = vand.u32 2147483647, %v203
        %v300 = vand.u32 2147483647, %v204
        %v301 = vand.u32 2147483647, %v205
        %v302 = vand.u32 2147483647, %v206
        %v303 = vand.u32 2147483647, %v207
        %v304 = vand.u32 2147483647, %v208
        %v305 = vand.u32 2147483647, %v209
        %v306 = vand.u32 2147483647, %v210
        %v307 = vand.u32 2147483647, %v211
        %v308 = vand.u32 2147483647, %v212
        %v309 = vand.u32 2147483647, %v213
        %v310 = vand.u32 2147483647, %v214
        %v311 = vand.u32 2147483647, %v215
        %v312 = vand.u32 2147483647, %v216
        %v313 = vand.u32 2147483647, %v217
        %v314 = vand.u32 2147483647, %v218
        %v315 = vand.u32 2147483647, %v219
        %v316 = vand.u32 2147483647, %v220
        %v317 = vand.u32 2147483647, %v221
        %v318 = vand.u32 2147483647, %v222
        %v319 = vand.u32 2147483647, %v223
        %v320 = vand.u32 2147483647, %v224
        %v321 = vand.u32 2147483647, %v225
        %v322 = vand.u32 2147483647, %v226
        %v323 = vand.u32 2147483647, %v227
        %v324 = vand.u32 2147483647, %v228
        %v325 = vand.u32 2147483647, %v229
        %v326 = vand.u32 2147483647, %v230
        %v327 = vand.u32 2147483647, %v231
        %v328 = vand.u32 2147483647, %v232
        %v329 = vand.u32 2147483647, %v233
        %v330 = vand.u32 2147483647, %v234
        %v331 = vand.u32 2147483647, %v235
        %v332 = vand.u32 2147483647, %v236
        %v333 = vand.u32 2147483647, %v237
        %v334 = vand.u32 2147483647, %v238
        %v335 = vand.u32 2147483647, %v239
        %v336 = vand.u32 2147483647, %v240
        %v337 = vand.u32 2147483647, %v241
        %v338 = vand.u32 2147483647, %v242
        %v339 = vand.u32 2147483647, %v243
        %v340 = vand.u32 2147483647, %v244
        %v341 = vand.u32 2147483647, %v245
        %v342 = vand.u32 2147483647, %v246
        %v343 = vand.u32 2147483647, %v247
        %v344 = vand.u32 2147483647, %v248
        %v345 = vand.u32 2147483647, %v249
        %v346 = vand.u32 2147483647, %v250
        %v347 = vand.u32 2147483647, %v251
        %v348 = vand.u32 2147483647, %v252
        %v349 = vand.u32 2147483647, %v253
        %v350 = vand.u32 2147483647, %v254
        %v351 = vand.u32 2147483647, %v255
        %v352 = vand.u32 2147483647, %v256
        %v353 = vand.u32 2147483647, %v257
        %v354 = vand.u32 2147483647, %v258
        %v355 = vand.u32 2147483647, %v259
        %v356 = vand.u32 2147483647, %v260
        %v357 = vand.u32 2147483647, %v261
        %v358 = vand.u32 2147483647, %v262
        %v359 = vand.u32 2147483647, %v263
        %v360 = vand.u32 2147483647, %v264
        %v361 = vand.u32 2147483647, %v265
        %v362 = vand.u32 2147483647, %v266
        %v363 = vand.u32 2147483647, %v267
        %v364 = vand.u32 2147483647, %v268
        %v365 = vand.u32 2147483647, %v269
        %v366 = vand.u32 2147483647, %v270
        %v367 = vand.u32 2147483647, %v271
        %v368 = vand.u32 2147483647, %v272
        %v369 = vand.u32 2147483647, %v273
        %v370 = vand.u32 2147483647, %v274
        %v371 = vand.u32 2147483647, %v275
        %v372 = vand.u32 2147483647, %v276
        %v373 = vand.u32 2147483647, %v277
        %v374 = vand.u32 2147483647, %v278
        %v375 = vand.u32 2147483647, %v279
        %v376 = vand.u32 2147483647, %v280
        %v377 = vstv %s184
        %v378 = vsub.f32 %v281, %v377
        %v379 = vsub.f32 %v282, %v377
        %v380 = vsub.f32 %v283, %v377
        %v381 = vsub.f32 %v284, %v377
        %v382 = vsub.f32 %v285, %v377
        %v383 = vsub.f32 %v286, %v377
        %v384 = vsub.f32 %v287, %v377
        %v385 = vsub.f32 %v288, %v377
        %v386 = vsub.f32 %v289, %v377
        %v387 = vsub.f32 %v290, %v377
        %v388 = vsub.f32 %v291, %v377
        %v389 = vsub.f32 %v292, %v377
        %v390 = vsub.f32 %v293, %v377
        %v391 = vsub.f32 %v294, %v377
        %v392 = vsub.f32 %v295, %v377
        %v393 = vsub.f32 %v296, %v377
        %v394 = vsub.f32 %v297, %v377
        %v395 = vsub.f32 %v298, %v377
        %v396 = vsub.f32 %v299, %v377
        %v397 = vsub.f32 %v300, %v377
        %v398 = vsub.f32 %v301, %v377
        %v399 = vsub.f32 %v302, %v377
        %v400 = vsub.f32 %v303, %v377
        %v401 = vsub.f32 %v304, %v377
        %v402 = vsub.f32 %v305, %v377
        %v403 = vsub.f32 %v306, %v377
        %v404 = vsub.f32 %v307, %v377
        %v405 = vsub.f32 %v308, %v377
        %v406 = vsub.f32 %v309, %v377
        %v407 = vsub.f32 %v310, %v377
        %v408 = vsub.f32 %v311, %v377
        %v409 = vsub.f32 %v312, %v377
        %v410 = vsub.f32 %v313, %v377
        %v411 = vsub.f32 %v314, %v377
        %v412 = vsub.f32 %v315, %v377
        %v413 = vsub.f32 %v316, %v377
        %v414 = vsub.f32 %v317, %v377
        %v415 = vsub.f32 %v318, %v377
        %v416 = vsub.f32 %v319, %v377
        %v417 = vsub.f32 %v320, %v377
        %v418 = vsub.f32 %v321, %v377
        %v419 = vsub.f32 %v322, %v377
        %v420 = vsub.f32 %v323, %v377
        %v421 = vsub.f32 %v324, %v377
        %v422 = vsub.f32 %v325, %v377
        %v423 = vsub.f32 %v326, %v377
        %v424 = vsub.f32 %v327, %v377
        %v425 = vsub.f32 %v328, %v377
        %v426 = vsub.f32 %v329, %v377
        %v427 = vsub.f32 %v330, %v377
        %v428 = vsub.f32 %v331, %v377
        %v429 = vsub.f32 %v332, %v377
        %v430 = vsub.f32 %v333, %v377
        %v431 = vsub.f32 %v334, %v377
        %v432 = vsub.f32 %v335, %v377
        %v433 = vsub.f32 %v336, %v377
        %v434 = vsub.f32 %v337, %v377
        %v435 = vsub.f32 %v338, %v377
        %v436 = vsub.f32 %v339, %v377
        %v437 = vsub.f32 %v340, %v377
        %v438 = vsub.f32 %v341, %v377
        %v439 = vsub.f32 %v342, %v377
        %v440 = vsub.f32 %v343, %v377
        %v441 = vsub.f32 %v344, %v377
        %v442 = vsub.f32 %v345, %v377
        %v443 = vsub.f32 %v346, %v377
        %v444 = vsub.f32 %v347, %v377
        %v445 = vsub.f32 %v348, %v377
        %v446 = vsub.f32 %v349, %v377
        %v447 = vsub.f32 %v350, %v377
        %v448 = vsub.f32 %v351, %v377
        %v449 = vsub.f32 %v352, %v377
        %v450 = vsub.f32 %v353, %v377
        %v451 = vsub.f32 %v354, %v377
        %v452 = vsub.f32 %v355, %v377
        %v453 = vsub.f32 %v356, %v377
        %v454 = vsub.f32 %v357, %v377
        %v455 = vsub.f32 %v358, %v377
        %v456 = vsub.f32 %v359, %v377
        %v457 = vsub.f32 %v360, %v377
        %v458 = vsub.f32 %v361, %v377
        %v459 = vsub.f32 %v362, %v377
        %v460 = vsub.f32 %v363, %v377
        %v461 = vsub.f32 %v364, %v377
        %v462 = vsub.f32 %v365, %v377
        %v463 = vsub.f32 %v366, %v377
        %v464 = vsub.f32 %v367, %v377
        %v465 = vsub.f32 %v368, %v377
        %v466 = vsub.f32 %v369, %v377
        %v467 = vsub.f32 %v370, %v377
        %v468 = vsub.f32 %v371, %v377
        %v469 = vsub.f32 %v372, %v377
        %v470 = vsub.f32 %v373, %v377
        %v471 = vsub.f32 %v374, %v377
        %v472 = vsub.f32 %v375, %v377
        %v473 = vsub.f32 %v376, %v377
        %v474 = vmul.f32 %v378, 250.0
        %v475 = vmul.f32 %v379, 250.0
        %v476 = vmul.f32 %v380, 250.0
        %v477 = vmul.f32 %v381, 250.0
        %v478 = vmul.f32 %v382, 250.0
        %v479 = vmul.f32 %v383, 250.0
        %v480 = vmul.f32 %v384, 250.0
        %v481 = vmul.f32 %v385, 250.0
        %v482 = vmul.f32 %v386, 250.0
        %v483 = vmul.f32 %v387, 250.0
        %v484 = vmul.f32 %v388, 250.0
        %v485 = vmul.f32 %v389, 250.0
        %v486 = vmul.f32 %v390, 250.0
        %v487 = vmul.f32 %v391, 250.0
        %v488 = vmul.f32 %v392, 250.0
        %v489 = vmul.f32 %v393, 250.0
        %v490 = vmul.f32 %v394, 250.0
        %v491 = vmul.f32 %v395, 250.0
        %v492 = vmul.f32 %v396, 250.0
        %v493 = vmul.f32 %v397, 250.0
        %v494 = vmul.f32 %v398, 250.0
        %v495 = vmul.f32 %v399, 250.0
        %v496 = vmul.f32 %v400, 250.0
        %v497 = vmul.f32 %v401, 250.0
        %v498 = vmul.f32 %v402, 250.0
        %v499 = vmul.f32 %v403, 250.0
        %v500 = vmul.f32 %v404, 250.0
        %v501 = vmul.f32 %v405, 250.0
        %v502 = vmul.f32 %v406, 250.0
        %v503 = vmul.f32 %v407, 250.0
        %v504 = vmul.f32 %v408, 250.0
        %v505 = vmul.f32 %v409, 250.0
        %v506 = vmul.f32 %v410, 250.0
        %v507 = vmul.f32 %v411, 250.0
        %v508 = vmul.f32 %v412, 250.0
        %v509 = vmul.f32 %v413, 250.0
        %v510 = vmul.f32 %v414, 250.0
        %v511 = vmul.f32 %v415, 250.0
        %v512 = vmul.f32 %v416, 250.0
        %v513 = vmul.f32 %v417, 250.0
        %v514 = vmul.f32 %v418, 250.0
        %v515 = vmul.f32 %v419, 250.0
        %v516 = vmul.f32 %v420, 250.0
        %v517 = vmul.f32 %v421, 250.0
        %v518 = vmul.f32 %v422, 250.0
        %v519 = vmul.f32 %v423, 250.0
        %v520 = vmul.f32 %v424, 250.0
        %v521 = vmul.f32 %v425, 250.0
        %v522 = vmul.f32 %v426, 250.0
        %v523 = vmul.f32 %v427, 250.0
        %v524 = vmul.f32 %v428, 250.0
        %v525 = vmul.f32 %v429, 250.0
        %v526 = vmul.f32 %v430, 250.0
        %v527 = vmul.f32 %v431, 250.0
        %v528 = vmul.f32 %v432, 250.0
        %v529 = vmul.f32 %v433, 250.0
        %v530 = vmul.f32 %v434, 250.0
        %v531 = vmul.f32 %v435, 250.0
        %v532 = vmul.f32 %v436, 250.0
        %v533 = vmul.f32 %v437, 250.0
        %v534 = vmul.f32 %v438, 250.0
        %v535 = vmul.f32 %v439, 250.0
        %v536 = vmul.f32 %v440, 250.0
        %v537 = vmul.f32 %v441, 250.0
        %v538 = vmul.f32 %v442, 250.0
        %v539 = vmul.f32 %v443, 250.0
        %v540 = vmul.f32 %v444, 250.0
        %v541 = vmul.f32 %v445, 250.0
        %v542 = vmul.f32 %v446, 250.0
        %v543 = vmul.f32 %v447, 250.0
        %v544 = vmul.f32 %v448, 250.0
        %v545 = vmul.f32 %v449, 250.0
        %v546 = vmul.f32 %v450, 250.0
        %v547 = vmul.f32 %v451, 250.0
        %v548 = vmul.f32 %v452, 250.0
        %v549 = vmul.f32 %v453, 250.0
        %v550 = vmul.f32 %v454, 250.0
        %v551 = vmul.f32 %v455, 250.0
        %v552 = vmul.f32 %v456, 250.0
        %v553 = vmul.f32 %v457, 250.0
        %v554 = vmul.f32 %v458, 250.0
        %v555 = vmul.f32 %v459, 250.0
        %v556 = vmul.f32 %v460, 250.0
        %v557 = vmul.f32 %v461, 250.0
        %v558 = vmul.f32 %v462, 250.0
        %v559 = vmul.f32 %v463, 250.0
        %v560 = vmul.f32 %v464, 250.0
        %v561 = vmul.f32 %v465, 250.0
        %v562 = vmul.f32 %v466, 250.0
        %v563 = vmul.f32 %v467, 250.0
        %v564 = vmul.f32 %v468, 250.0
        %v565 = vmul.f32 %v469, 250.0
        %v566 = vmul.f32 %v470, 250.0
        %v567 = vmul.f32 %v471, 250.0
        %v568 = vmul.f32 %v472, 250.0
        %v569 = vmul.f32 %v473, 250.0
        %v570 = vtanh.pop %v474
        %v571 = vtanh.pop %v475
        %v572 = vtanh.pop %v476
        %v573 = vtanh.pop %v477
        %v574 = vtanh.pop %v478
        %v575 = vtanh.pop %v479
        %v576 = vtanh.pop %v480
        %v577 = vtanh.pop %v481
        %v578 = vtanh.pop %v482
        %v579 = vtanh.pop %v483
        %v580 = vtanh.pop %v484
        %v581 = vtanh.pop %v485
        %v582 = vtanh.pop %v486
        %v583 = vtanh.pop %v487
        %v584 = vtanh.pop %v488
        %v585 = vtanh.pop %v489
        %v586 = vtanh.pop %v490
        %v587 = vtanh.pop %v491
        %v588 = vtanh.pop %v492
        %v589 = vtanh.pop %v493
        %v590 = vtanh.pop %v494
        %v591 = vtanh.pop %v495
        %v592 = vtanh.pop %v496
        %v593 = vtanh.pop %v497
        %v594 = vtanh.pop %v498
        %v595 = vtanh.pop %v499
        %v596 = vtanh.pop %v500
        %v597 = vtanh.pop %v501
        %v598 = vtanh.pop %v502
        %v599 = vtanh.pop %v503
        %v600 = vtanh.pop %v504
        %v601 = vtanh.pop %v505
        %v602 = vtanh.pop %v506
        %v603 = vtanh.pop %v507
        %v604 = vtanh.pop %v508
        %v605 = vtanh.pop %v509
        %v606 = vtanh.pop %v510
        %v607 = vtanh.pop %v511
        %v608 = vtanh.pop %v512
        %v609 = vtanh.pop %v513
        %v610 = vtanh.pop %v514
        %v611 = vtanh.pop %v515
        %v612 = vtanh.pop %v516
        %v613 = vtanh.pop %v517
        %v614 = vtanh.pop %v518
        %v615 = vtanh.pop %v519
        %v616 = vtanh.pop %v520
        %v617 = vtanh.pop %v521
        %v618 = vtanh.pop %v522
        %v619 = vtanh.pop %v523
        %v620 = vtanh.pop %v524
        %v621 = vtanh.pop %v525
        %v622 = vtanh.pop %v526
        %v623 = vtanh.pop %v527
        %v624 = vtanh.pop %v528
        %v625 = vtanh.pop %v529
        %v626 = vtanh.pop %v530
        %v627 = vtanh.pop %v531
        %v628 = vtanh.pop %v532
        %v629 = vtanh.pop %v533
        %v630 = vtanh.pop %v534
        %v631 = vtanh.pop %v535
        %v632 = vtanh.pop %v536
        %v633 = vtanh.pop %v537
        %v634 = vtanh.pop %v538
        %v635 = vtanh.pop %v539
        %v636 = vtanh.pop %v540
        %v637 = vtanh.pop %v541
        %v638 = vtanh.pop %v542
        %v639 = vtanh.pop %v543
        %v640 = vtanh.pop %v544
        %v641 = vtanh.pop %v545
        %v642 = vtanh.pop %v546
        %v643 = vtanh.pop %v547
        %v644 = vtanh.pop %v548
        %v645 = vtanh.pop %v549
        %v646 = vtanh.pop %v550
        %v647 = vtanh.pop %v551
        %v648 = vtanh.pop %v552
        %v649 = vtanh.pop %v553
        %v650 = vtanh.pop %v554
        %v651 = vtanh.pop %v555
        %v652 = vtanh.pop %v556
        %v653 = vtanh.pop %v557
        %v654 = vtanh.pop %v558
        %v655 = vtanh.pop %v559
        %v656 = vtanh.pop %v560
        %v657 = vtanh.pop %v561
        %v658 = vtanh.pop %v562
        %v659 = vtanh.pop %v563
        %v660 = vtanh.pop %v564
        %v661 = vtanh.pop %v565
        %v662 = vtanh.pop %v566
        %v663 = vtanh.pop %v567
        %v664 = vtanh.pop %v568
        %v665 = vtanh.pop %v569
        %v666 = vmul.f32 %v185, 0.5
        %v667 = vmul.f32 %v186, 0.5
        %v668 = vmul.f32 %v187, 0.5
        %v669 = vmul.f32 %v188, 0.5
        %v670 = vmul.f32 %v189, 0.5
        %v671 = vmul.f32 %v190, 0.5
        %v672 = vmul.f32 %v191, 0.5
        %v673 = vmul.f32 %v192, 0.5
        %v674 = vmul.f32 %v193, 0.5
        %v675 = vmul.f32 %v194, 0.5
        %v676 = vmul.f32 %v195, 0.5
        %v677 = vmul.f32 %v196, 0.5
        %v678 = vmul.f32 %v197, 0.5
        %v679 = vmul.f32 %v198, 0.5
        %v680 = vmul.f32 %v199, 0.5
        %v681 = vmul.f32 %v200, 0.5
        %v682 = vmul.f32 %v201, 0.5
        %v683 = vmul.f32 %v202, 0.5
        %v684 = vmul.f32 %v203, 0.5
        %v685 = vmul.f32 %v204, 0.5
        %v686 = vmul.f32 %v205, 0.5
        %v687 = vmul.f32 %v206, 0.5
        %v688 = vmul.f32 %v207, 0.5
        %v689 = vmul.f32 %v208, 0.5
        %v690 = vmul.f32 %v209, 0.5
        %v691 = vmul.f32 %v210, 0.5
        %v692 = vmul.f32 %v211, 0.5
        %v693 = vmul.f32 %v212, 0.5
        %v694 = vmul.f32 %v213, 0.5
        %v695 = vmul.f32 %v214, 0.5
        %v696 = vmul.f32 %v215, 0.5
        %v697 = vmul.f32 %v216, 0.5
        %v698 = vmul.f32 %v217, 0.5
        %v699 = vmul.f32 %v218, 0.5
        %v700 = vmul.f32 %v219, 0.5
        %v701 = vmul.f32 %v220, 0.5
        %v702 = vmul.f32 %v221, 0.5
        %v703 = vmul.f32 %v222, 0.5
        %v704 = vmul.f32 %v223, 0.5
        %v705 = vmul.f32 %v224, 0.5
        %v706 = vmul.f32 %v225, 0.5
        %v707 = vmul.f32 %v226, 0.5
        %v708 = vmul.f32 %v227, 0.5
        %v709 = vmul.f32 %v228, 0.5
        %v710 = vmul.f32 %v229, 0.5
        %v711 = vmul.f32 %v230, 0.5
        %v712 = vmul.f32 %v231, 0.5
        %v713 = vmul.f32 %v232, 0.5
        %v714 = vmul.f32 %v233, 0.5
        %v715 = vmul.f32 %v234, 0.5
        %v716 = vmul.f32 %v235, 0.5
        %v717 = vmul.f32 %v236, 0.5
        %v718 = vmul.f32 %v237, 0.5
        %v719 = vmul.f32 %v238, 0.5
        %v720 = vmul.f32 %v239, 0.5
        %v721 = vmul.f32 %v240, 0.5
        %v722 = vmul.f32 %v241, 0.5
        %v723 = vmul.f32 %v242, 0.5
        %v724 = vmul.f32 %v243, 0.5
        %v725 = vmul.f32 %v244, 0.5
        %v726 = vmul.f32 %v245, 0.5
        %v727 = vmul.f32 %v246, 0.5
        %v728 = vmul.f32 %v247, 0.5
        %v729 = vmul.f32 %v248, 0.5
        %v730 = vmul.f32 %v249, 0.5
        %v731 = vmul.f32 %v250, 0.5
        %v732 = vmul.f32 %v251, 0.5
        %v733 = vmul.f32 %v252, 0.5
        %v734 = vmul.f32 %v253, 0.5
        %v735 = vmul.f32 %v254, 0.5
        %v736 = vmul.f32 %v255, 0.5
        %v737 = vmul.f32 %v256, 0.5
        %v738 = vmul.f32 %v257, 0.5
        %v739 = vmul.f32 %v258, 0.5
        %v740 = vmul.f32 %v259, 0.5
        %v741 = vmul.f32 %v260, 0.5
        %v742 = vmul.f32 %v261, 0.5
        %v743 = vmul.f32 %v262, 0.5
        %v744 = vmul.f32 %v263, 0.5
        %v745 = vmul.f32 %v264, 0.5
        %v746 = vmul.f32 %v265, 0.5
        %v747 = vmul.f32 %v266, 0.5
        %v748 = vmul.f32 %v267, 0.5
        %v749 = vmul.f32 %v268, 0.5
        %v750 = vmul.f32 %v269, 0.5
        %v751 = vmul.f32 %v270, 0.5
        %v752 = vmul.f32 %v271, 0.5
        %v753 = vmul.f32 %v272, 0.5
        %v754 = vmul.f32 %v273, 0.5
        %v755 = vmul.f32 %v274, 0.5
        %v756 = vmul.f32 %v275, 0.5
        %v757 = vmul.f32 %v276, 0.5
        %v758 = vmul.f32 %v277, 0.5
        %v759 = vmul.f32 %v278, 0.5
        %v760 = vmul.f32 %v279, 0.5
        %v761 = vmul.f32 %v280, 0.5
        %v762 = vadd.f32 %v570, 1.0
        %v763 = vadd.f32 %v571, 1.0
        %v764 = vadd.f32 %v572, 1.0
        %v765 = vadd.f32 %v573, 1.0
        %v766 = vadd.f32 %v574, 1.0
        %v767 = vadd.f32 %v575, 1.0
        %v768 = vadd.f32 %v576, 1.0
        %v769 = vadd.f32 %v577, 1.0
        %v770 = vadd.f32 %v578, 1.0
        %v771 = vadd.f32 %v579, 1.0
        %v772 = vadd.f32 %v580, 1.0
        %v773 = vadd.f32 %v581, 1.0
        %v774 = vadd.f32 %v582, 1.0
        %v775 = vadd.f32 %v583, 1.0
        %v776 = vadd.f32 %v584, 1.0
        %v777 = vadd.f32 %v585, 1.0
        %v778 = vadd.f32 %v586, 1.0
        %v779 = vadd.f32 %v587, 1.0
        %v780 = vadd.f32 %v588, 1.0
        %v781 = vadd.f32 %v589, 1.0
        %v782 = vadd.f32 %v590, 1.0
        %v783 = vadd.f32 %v591, 1.0
        %v784 = vadd.f32 %v592, 1.0
        %v785 = vadd.f32 %v593, 1.0
        %v786 = vadd.f32 %v594, 1.0
        %v787 = vadd.f32 %v595, 1.0
        %v788 = vadd.f32 %v596, 1.0
        %v789 = vadd.f32 %v597, 1.0
        %v790 = vadd.f32 %v598, 1.0
        %v791 = vadd.f32 %v599, 1.0
        %v792 = vadd.f32 %v600, 1.0
        %v793 = vadd.f32 %v601, 1.0
        %v794 = vadd.f32 %v602, 1.0
        %v795 = vadd.f32 %v603, 1.0
        %v796 = vadd.f32 %v604, 1.0
        %v797 = vadd.f32 %v605, 1.0
        %v798 = vadd.f32 %v606, 1.0
        %v799 = vadd.f32 %v607, 1.0
        %v800 = vadd.f32 %v608, 1.0
        %v801 = vadd.f32 %v609, 1.0
        %v802 = vadd.f32 %v610, 1.0
        %v803 = vadd.f32 %v611, 1.0
        %v804 = vadd.f32 %v612, 1.0
        %v805 = vadd.f32 %v613, 1.0
        %v806 = vadd.f32 %v614, 1.0
        %v807 = vadd.f32 %v615, 1.0
        %v808 = vadd.f32 %v616, 1.0
        %v809 = vadd.f32 %v617, 1.0
        %v810 = vadd.f32 %v618, 1.0
        %v811 = vadd.f32 %v619, 1.0
        %v812 = vadd.f32 %v620, 1.0
        %v813 = vadd.f32 %v621, 1.0
        %v814 = vadd.f32 %v622, 1.0
        %v815 = vadd.f32 %v623, 1.0
        %v816 = vadd.f32 %v624, 1.0
        %v817 = vadd.f32 %v625, 1.0
        %v818 = vadd.f32 %v626, 1.0
        %v819 = vadd.f32 %v627, 1.0
        %v820 = vadd.f32 %v628, 1.0
        %v821 = vadd.f32 %v629, 1.0
        %v822 = vadd.f32 %v630, 1.0
        %v823 = vadd.f32 %v631, 1.0
        %v824 = vadd.f32 %v632, 1.0
        %v825 = vadd.f32 %v633, 1.0
        %v826 = vadd.f32 %v634, 1.0
        %v827 = vadd.f32 %v635, 1.0
        %v828 = vadd.f32 %v636, 1.0
        %v829 = vadd.f32 %v637, 1.0
        %v830 = vadd.f32 %v638, 1.0
        %v831 = vadd.f32 %v639, 1.0
        %v832 = vadd.f32 %v640, 1.0
        %v833 = vadd.f32 %v641, 1.0
        %v834 = vadd.f32 %v642, 1.0
        %v835 = vadd.f32 %v643, 1.0
        %v836 = vadd.f32 %v644, 1.0
        %v837 = vadd.f32 %v645, 1.0
        %v838 = vadd.f32 %v646, 1.0
        %v839 = vadd.f32 %v647, 1.0
        %v840 = vadd.f32 %v648, 1.0
        %v841 = vadd.f32 %v649, 1.0
        %v842 = vadd.f32 %v650, 1.0
        %v843 = vadd.f32 %v651, 1.0
        %v844 = vadd.f32 %v652, 1.0
        %v845 = vadd.f32 %v653, 1.0
        %v846 = vadd.f32 %v654, 1.0
        %v847 = vadd.f32 %v655, 1.0
        %v848 = vadd.f32 %v656, 1.0
        %v849 = vadd.f32 %v657, 1.0
        %v850 = vadd.f32 %v658, 1.0
        %v851 = vadd.f32 %v659, 1.0
        %v852 = vadd.f32 %v660, 1.0
        %v853 = vadd.f32 %v661, 1.0
        %v854 = vadd.f32 %v662, 1.0
        %v855 = vadd.f32 %v663, 1.0
        %v856 = vadd.f32 %v664, 1.0
        %v857 = vadd.f32 %v665, 1.0
        %v858 = vmul.f32 %v666, %v762
        %v859 = vmul.f32 %v667, %v763
        %v860 = vmul.f32 %v668, %v764
        %v861 = vmul.f32 %v669, %v765
        %v862 = vmul.f32 %v670, %v766
        %v863 = vmul.f32 %v671, %v767
        %v864 = vmul.f32 %v672, %v768
        %v865 = vmul.f32 %v673, %v769
        %v866 = vmul.f32 %v674, %v770
        %v867 = vmul.f32 %v675, %v771
        %v868 = vmul.f32 %v676, %v772
        %v869 = vmul.f32 %v677, %v773
        %v870 = vmul.f32 %v678, %v774
        %v871 = vmul.f32 %v679, %v775
        %v872 = vmul.f32 %v680, %v776
        %v873 = vmul.f32 %v681, %v777
        %v874 = vmul.f32 %v682, %v778
        %v875 = vmul.f32 %v683, %v779
        %v876 = vmul.f32 %v684, %v780
        %v877 = vmul.f32 %v685, %v781
        %v878 = vmul.f32 %v686, %v782
        %v879 = vmul.f32 %v687, %v783
        %v880 = vmul.f32 %v688, %v784
        %v881 = vmul.f32 %v689, %v785
        %v882 = vmul.f32 %v690, %v786
        %v883 = vmul.f32 %v691, %v787
        %v884 = vmul.f32 %v692, %v788
        %v885 = vmul.f32 %v693, %v789
        %v886 = vmul.f32 %v694, %v790
        %v887 = vmul.f32 %v695, %v791
        %v888 = vmul.f32 %v696, %v792
        %v889 = vmul.f32 %v697, %v793
        %v890 = vmul.f32 %v698, %v794
        %v891 = vmul.f32 %v699, %v795
        %v892 = vmul.f32 %v700, %v796
        %v893 = vmul.f32 %v701, %v797
        %v894 = vmul.f32 %v702, %v798
        %v895 = vmul.f32 %v703, %v799
        %v896 = vmul.f32 %v704, %v800
        %v897 = vmul.f32 %v705, %v801
        %v898 = vmul.f32 %v706, %v802
        %v899 = vmul.f32 %v707, %v803
        %v900 = vmul.f32 %v708, %v804
        %v901 = vmul.f32 %v709, %v805
        %v902 = vmul.f32 %v710, %v806
        %v903 = vmul.f32 %v711, %v807
        %v904 = vmul.f32 %v712, %v808
        %v905 = vmul.f32 %v713, %v809
        %v906 = vmul.f32 %v714, %v810
        %v907 = vmul.f32 %v715, %v811
        %v908 = vmul.f32 %v716, %v812
        %v909 = vmul.f32 %v717, %v813
        %v910 = vmul.f32 %v718, %v814
        %v911 = vmul.f32 %v719, %v815
        %v912 = vmul.f32 %v720, %v816
        %v913 = vmul.f32 %v721, %v817
        %v914 = vmul.f32 %v722, %v818
        %v915 = vmul.f32 %v723, %v819
        %v916 = vmul.f32 %v724, %v820
        %v917 = vmul.f32 %v725, %v821
        %v918 = vmul.f32 %v726, %v822
        %v919 = vmul.f32 %v727, %v823
        %v920 = vmul.f32 %v728, %v824
        %v921 = vmul.f32 %v729, %v825
        %v922 = vmul.f32 %v730, %v826
        %v923 = vmul.f32 %v731, %v827
        %v924 = vmul.f32 %v732, %v828
        %v925 = vmul.f32 %v733, %v829
        %v926 = vmul.f32 %v734, %v830
        %v927 = vmul.f32 %v735, %v831
        %v928 = vmul.f32 %v736, %v832
        %v929 = vmul.f32 %v737, %v833
        %v930 = vmul.f32 %v738, %v834
        %v931 = vmul.f32 %v739, %v835
        %v932 = vmul.f32 %v740, %v836
        %v933 = vmul.f32 %v741, %v837
        %v934 = vmul.f32 %v742, %v838
        %v935 = vmul.f32 %v743, %v839
        %v936 = vmul.f32 %v744, %v840
        %v937 = vmul.f32 %v745, %v841
        %v938 = vmul.f32 %v746, %v842
        %v939 = vmul.f32 %v747, %v843
        %v940 = vmul.f32 %v748, %v844
        %v941 = vmul.f32 %v749, %v845
        %v942 = vmul.f32 %v750, %v846
        %v943 = vmul.f32 %v751, %v847
        %v944 = vmul.f32 %v752, %v848
        %v945 = vmul.f32 %v753, %v849
        %v946 = vmul.f32 %v754, %v850
        %v947 = vmul.f32 %v755, %v851
        %v948 = vmul.f32 %v756, %v852
        %v949 = vmul.f32 %v757, %v853
        %v950 = vmul.f32 %v758, %v854
        %v951 = vmul.f32 %v759, %v855
        %v952 = vmul.f32 %v760, %v856
        %v953 = vmul.f32 %v761, %v857
        %954 = vst [vmem:[%s170] sm:$0xff] %v858
        %955 = vst [vmem:[%s170 + $0x8] sm:$0xff] %v859
        %956 = vst [vmem:[%s170 + $0x10] sm:$0xff] %v860
        %957 = vst [vmem:[%s170 + $0x18] sm:$0xff] %v861
        %958 = vst [vmem:[%s170 + $0x20] sm:$0xff] %v862
        %959 = vst [vmem:[%s170 + $0x28] sm:$0xff] %v863
        %960 = vst [vmem:[%s170 + $0x30] sm:$0xff] %v864
        %961 = vst [vmem:[%s170 + $0x38] sm:$0xff] %v865
        %962 = vst [vmem:[%s170 + $0x40] sm:$0xff] %v866
        %963 = vst [vmem:[%s170 + $0x48] sm:$0xff] %v867
        %964 = vst [vmem:[%s170 + $0x50] sm:$0xff] %v868
        %965 = vst [vmem:[%s170 + $0x58] sm:$0xff] %v869
        %966 = vst [vmem:[%s170 + $0x60] sm:$0xff] %v870
        %967 = vst [vmem:[%s170 + $0x68] sm:$0xff] %v871
        %968 = vst [vmem:[%s170 + $0x70] sm:$0xff] %v872
        %969 = vst [vmem:[%s170 + $0x78] sm:$0xff] %v873
        %970 = vst [vmem:[%s170 + $0x80] sm:$0xff] %v874
        %971 = vst [vmem:[%s170 + $0x88] sm:$0xff] %v875
        %972 = vst [vmem:[%s170 + $0x90] sm:$0xff] %v876
        %973 = vst [vmem:[%s170 + $0x98] sm:$0xff] %v877
        %974 = vst [vmem:[%s170 + $0xa0] sm:$0xff] %v878
        %975 = vst [vmem:[%s170 + $0xa8] sm:$0xff] %v879
        %976 = vst [vmem:[%s170 + $0xb0] sm:$0xff] %v880
        %977 = vst [vmem:[%s170 + $0xb8] sm:$0xff] %v881
        %978 = vst [vmem:[%s170 + $0xc0] sm:$0xff] %v882
        %979 = vst [vmem:[%s170 + $0xc8] sm:$0xff] %v883
        %980 = vst [vmem:[%s170 + $0xd0] sm:$0xff] %v884
        %981 = vst [vmem:[%s170 + $0xd8] sm:$0xff] %v885
        %982 = vst [vmem:[%s170 + $0xe0] sm:$0xff] %v886
        %983 = vst [vmem:[%s170 + $0xe8] sm:$0xff] %v887
        %984 = vst [vmem:[%s170 + $0xf0] sm:$0xff] %v888
        %985 = vst [vmem:[%s170 + $0xf8] sm:$0xff] %v889
        %986 = vst [vmem:[%s170 + $0x100] sm:$0xff] %v890
        %987 = vst [vmem:[%s170 + $0x108] sm:$0xff] %v891
        %988 = vst [vmem:[%s170 + $0x110] sm:$0xff] %v892
        %989 = vst [vmem:[%s170 + $0x118] sm:$0xff] %v893
        %990 = vst [vmem:[%s170 + $0x120] sm:$0xff] %v894
        %991 = vst [vmem:[%s170 + $0x128] sm:$0xff] %v895
        %992 = vst [vmem:[%s170 + $0x130] sm:$0xff] %v896
        %993 = vst [vmem:[%s170 + $0x138] sm:$0xff] %v897
        %994 = vst [vmem:[%s170 + $0x140] sm:$0xff] %v898
        %995 = vst [vmem:[%s170 + $0x148] sm:$0xff] %v899
        %996 = vst [vmem:[%s170 + $0x150] sm:$0xff] %v900
        %997 = vst [vmem:[%s170 + $0x158] sm:$0xff] %v901
        %998 = vst [vmem:[%s170 + $0x160] sm:$0xff] %v902
        %999 = vst [vmem:[%s170 + $0x168] sm:$0xff] %v903
        %1000 = vst [vmem:[%s170 + $0x170] sm:$0xff] %v904
        %1001 = vst [vmem:[%s170 + $0x178] sm:$0xff] %v905
        %1002 = vst [vmem:[%s170 + $0x180] sm:$0xff] %v906
        %1003 = vst [vmem:[%s170 + $0x188] sm:$0xff] %v907
        %1004 = vst [vmem:[%s170 + $0x190] sm:$0xff] %v908
        %1005 = vst [vmem:[%s170 + $0x198] sm:$0xff] %v909
        %1006 = vst [vmem:[%s170 + $0x1a0] sm:$0xff] %v910
        %1007 = vst [vmem:[%s170 + $0x1a8] sm:$0xff] %v911
        %1008 = vst [vmem:[%s170 + $0x1b0] sm:$0xff] %v912
        %1009 = vst [vmem:[%s170 + $0x1b8] sm:$0xff] %v913
        %1010 = vst [vmem:[%s170 + $0x1c0] sm:$0xff] %v914
        %1011 = vst [vmem:[%s170 + $0x1c8] sm:$0xff] %v915
        %1012 = vst [vmem:[%s170 + $0x1d0] sm:$0xff] %v916
        %1013 = vst [vmem:[%s170 + $0x1d8] sm:$0xff] %v917
        %1014 = vst [vmem:[%s170 + $0x1e0] sm:$0xff] %v918
        %1015 = vst [vmem:[%s170 + $0x1e8] sm:$0xff] %v919
        %1016 = vst [vmem:[%s170 + $0x1f0] sm:$0xff] %v920
        %1017 = vst [vmem:[%s170 + $0x1f8] sm:$0xff] %v921
        %1018 = vst [vmem:[%s170 + $0x200] sm:$0xff] %v922
        %1019 = vst [vmem:[%s170 + $0x208] sm:$0xff] %v923
        %1020 = vst [vmem:[%s170 + $0x210] sm:$0xff] %v924
        %1021 = vst [vmem:[%s170 + $0x218] sm:$0xff] %v925
        %1022 = vst [vmem:[%s170 + $0x220] sm:$0xff] %v926
        %1023 = vst [vmem:[%s170 + $0x228] sm:$0xff] %v927
        %1024 = vst [vmem:[%s170 + $0x230] sm:$0xff] %v928
        %1025 = vst [vmem:[%s170 + $0x238] sm:$0xff] %v929
        %1026 = vst [vmem:[%s170 + $0x240] sm:$0xff] %v930
        %1027 = vst [vmem:[%s170 + $0x248] sm:$0xff] %v931
        %1028 = vst [vmem:[%s170 + $0x250] sm:$0xff] %v932
        %1029 = vst [vmem:[%s170 + $0x258] sm:$0xff] %v933
        %1030 = vst [vmem:[%s170 + $0x260] sm:$0xff] %v934
        %1031 = vst [vmem:[%s170 + $0x268] sm:$0xff] %v935
        %1032 = vst [vmem:[%s170 + $0x270] sm:$0xff] %v936
        %1033 = vst [vmem:[%s170 + $0x278] sm:$0xff] %v937
        %1034 = vst [vmem:[%s170 + $0x280] sm:$0xff] %v938
        %1035 = vst [vmem:[%s170 + $0x288] sm:$0xff] %v939
        %1036 = vst [vmem:[%s170 + $0x290] sm:$0xff] %v940
        %1037 = vst [vmem:[%s170 + $0x298] sm:$0xff] %v941
        %1038 = vst [vmem:[%s170 + $0x2a0] sm:$0xff] %v942
        %1039 = vst [vmem:[%s170 + $0x2a8] sm:$0xff] %v943
        %1040 = vst [vmem:[%s170 + $0x2b0] sm:$0xff] %v944
        %1041 = vst [vmem:[%s170 + $0x2b8] sm:$0xff] %v945
        %1042 = vst [vmem:[%s170 + $0x2c0] sm:$0xff] %v946
        %1043 = vst [vmem:[%s170 + $0x2c8] sm:$0xff] %v947
        %1044 = vst [vmem:[%s170 + $0x2d0] sm:$0xff] %v948
        %1045 = vst [vmem:[%s170 + $0x2d8] sm:$0xff] %v949
        %1046 = vst [vmem:[%s170 + $0x2e0] sm:$0xff] %v950
        %1047 = vst [vmem:[%s170 + $0x2e8] sm:$0xff] %v951
        %1048 = vst [vmem:[%s170 + $0x2f0] sm:$0xff] %v952
        %1049 = vst [vmem:[%s170 + $0x2f8] sm:$0xff] %v953
        %s1050 = sand.u32 %s75, 1
        %s1051 = scalar_lea.sflag [#allocation5], %s1050
        %s1052 = sand.u32 %s75, 1
        %s1053 = smul.addr %s1052, 768
        %s1054 = scalar_lea.vmem [#allocation6], %s1053
        // Predicated region
        $region33: #{tpu_custom_call.1} parent=27 // pred_check
          %p1055 = pneg %p85
        $region34: #{tpu_custom_call.1} parent=27 // pred_check_branch
          %1057 = sbr.rel (%p1055) target = $region36
        $region35: #{tpu_custom_call.1} parent=27 // pred_region
          %s1058 = smul.u32 12, %s20
          %s1059 = ssub.s32 25, %s1058
          %p1060 = scmp.lt.s32.totalorder %s1059, 12
          %s1061 = scalar_select %p1060, %s1059, 12
          %s1062 = smul.u32 128, %s1061
          %s1063 = smul.u32 %s1062, 8
          %s1065 = ssub.s32 12288, %s1063
          %1066 = vsyncadd %s1051, %s1065
          %p1067 = scmp.ne.s32.totalorder 0, %s1063
          %s1068 = smul.addr %s1058, 8
          %s1069 = smul.addr %s1068, 128
          %s1070 = scalar_lea.hbm %s2, %s1069
          %s1071 = smul.u32 64, %s1061
          %s1072 = sshll.u32 %s1054, 4
          %s1073 = int_to_ptr.vmem [resolvable:$true] %s1072
          %s1074 = sshll.u32 %s1071, 4
          %1078 = dma.vmem_to_hbm [thread:$0]  (%p1067), %s1073, %s1074, %s1070, %s1051, 1024, 1024, 64
        $region36: #{tpu_custom_call.1} parent=27 // pred_fallthru
          _
      $region28: #{tpu_custom_call.1} parent=5 // pred_fallthru
        _
      %p1079 = scmp.le.s32.totalorder 2, %s15
      // Predicated region
      $region37: #{tpu_custom_call.1} parent=5 // pred_check
        %p1080 = pneg %p1079
      $region38: #{tpu_custom_call.1} parent=5 // pred_check_branch
        %1082 = sbr.rel (%p1080) target = $region40
      $region39: #{tpu_custom_call.1} parent=5 // pred_region
        %s1083 = ssub.s32 %s15, 2
        // Predicated region
        $region41: #{tpu_custom_call.1} parent=39 // pred_check
          %p1084 = pneg %p91
        $region42: #{tpu_custom_call.1} parent=39 // pred_check_branch
          %1086 = sbr.rel (%p1084) target = $region44
        $region43: #{tpu_custom_call.1} parent=39 // pred_region
          %s1087 = sand.u32 %s76, 1
          %s1088 = scalar_lea.sflag [#allocation5], %s1087
          %s1089 = sand.u32 %s76, 1
          %s1090 = smul.addr %s1089, 768
          %s1091 = scalar_lea.vmem [#allocation6], %s1090
          %1092 = dma.done %s1088, 12288
        $region44: #{tpu_custom_call.1} parent=39 // pred_fallthru
          _
      $region40: #{tpu_custom_call.1} parent=5 // pred_fallthru
        _
    $region6: #{tpu_custom_call.1} parent=1 // loop_footer
      %s19 = sadd.s32 1, %s15
    $region7: #{tpu_custom_call.1} parent=1 // loop_footer_branch
      %14 = sbr.rel target = $region3
    $region8: #{tpu_custom_call.1} parent=1 // loop_exit
      _
    %1093 = vsyncpa [#allocation4], 1
    %s1094 = scalar_lea.sflag [#allocation4], 1
    %1095 = vsyncpa %s1094, 1
    %1096 = vsyncpa [#allocation5], 1
    %s1097 = scalar_lea.sflag [#allocation5], 1
    %1098 = vsyncpa %s1097, 1

</llo_original>
